<compile_context>
chip_gen: v7x
topology: tpu7x:2x2x1
jax: 0.10.0
libtpu: 0.0.40
codegen_flags: <defaults>
</compile_context>

<pallas_src>
import jax
import jax.numpy as jnp
from jax.experimental import pallas as pl
from jax.experimental.pallas import tpu as pltpu


# ----------------------------------------------------------------------------
# Deterministic tokenizer stand-in (defines vocab size / target indices).
# ----------------------------------------------------------------------------
class Tokenizer:
    def __init__(self):
        specials = ["<pad>", "<cls>", "<eos>", "<unk>"]
        amino_acids = list("ACDEFGHIKLMNPQRSTVWY")  # 20 canonical AAs
        vocab = specials + amino_acids
        self.token_to_id = {tok: i for i, tok in enumerate(vocab)}

    def __len__(self):
        return len(self.token_to_id)


def _round_up(x, m):
    return (x + m - 1) // m * m


# ----------------------------------------------------------------------------
# Pallas kernel: fused  (x_bf16 @ W_bf16) [f32 acc]  +  fused_bias_f32
# ----------------------------------------------------------------------------
def enhanced_head_kernel(x_ref, w_ref, fb_ref, o_ref):
    # x_ref: (TM, H) bf16   w_ref: (H, Vp) bf16   fb_ref: (1, Vp) f32
    logits = jnp.dot(x_ref[...], w_ref[...], preferred_element_type=jnp.float32)
    o_ref[...] = logits + fb_ref[...]  # epilogue in f32 (v5e has no bf16 VPU)


def enhanced_model_forward(x, w, b, interaction_bias):
    """x: (B, S, H) float32. Returns (B, S, V) float32."""
    B, S, H = x.shape
    V = w.shape[1]
    M = B * S

    # Fold the two constant bias vectors into one (exact fusion).
    fused_bias = (b + interaction_bias).astype(jnp.float32).reshape(1, V)

    # Lane-pad vocab dim to a multiple of 128 for dense stores / full MXU tile.
    Vp = max(128, _round_up(V, 128))

    # Row-tile M.  TM multiple of 16 (bf16 sublane packing); cap at 512 so
    # double-buffered tiles stay well inside the v7x 64 MiB VMEM budget while
    # W / fused bias remain resident.
    if M <= 512:
        TM = _round_up(M, 16)
        Mp = TM
    else:
        TM = 512
        Mp = _round_up(M, TM)

    # Prepare / pad operands.  Padded rows of x and pad-vocab columns of W /
    # bias are zero; padded outputs are sliced away below -> semantics intact.
    x2d = x.reshape(M, H).astype(jnp.bfloat16)
    x2d = jnp.pad(x2d, ((0, Mp - M), (0, 0)))
    w_p = jnp.pad(w.astype(jnp.bfloat16), ((0, 0), (0, Vp - V)))
    fb_p = jnp.pad(fused_bias, ((0, 0), (0, Vp - V)))

    grid = (Mp // TM,)

    out2d = pl.pallas_call(
        enhanced_head_kernel,
        out_shape=jax.ShapeDtypeStruct((Mp, Vp), jnp.float32),
        grid=grid,
        in_specs=[
            pl.BlockSpec((TM, H), lambda i: (i, 0)),   # x: streamed per tile
            pl.BlockSpec((H, Vp), lambda i: (0, 0)),   # W: resident
            pl.BlockSpec((1, Vp), lambda i: (0, 0)),   # fused bias: resident
        ],
        out_specs=pl.BlockSpec((TM, Vp), lambda i: (i, 0)),
        compiler_params=pltpu.CompilerParams(
            # Independent row tiles: shard across both TCs on v7x.
            dimension_semantics=("parallel",),
        ),
    )(x2d, w_p, fb_p)

    # Slice off row padding and the zero pad-vocab columns (downstream
    # softmax/argmax must never see them).
    return out2d[:M, :V].reshape(B, S, V)


# ----------------------------------------------------------------------------
# Parameter construction (deterministic, mirrors EnhancedModel.__init__)
# ----------------------------------------------------------------------------
def make_params(key, hidden, tokenizer):
    V = len(tokenizer)
    kw, kb = jax.random.split(key)
    # synthetic base_model = Linear(hidden -> V)
    w = jax.random.normal(kw, (hidden, V), dtype=jnp.float32) * 0.02
    b = jax.random.normal(kb, (V,), dtype=jnp.float32) * 0.02

    # interaction_bias: zeros(len(tokenizer)); 0.1 at the target AA indices
    target_aa = ["E", "D", "K", "R", "S", "T", "N", "Q"]
    target_indices = jnp.array(
        [tokenizer.token_to_id[aa] for aa in target_aa], dtype=jnp.int32
    )
    interaction_bias = jnp.zeros((V,), dtype=jnp.float32)
    interaction_bias = interaction_bias.at[target_indices].set(0.1)
    return w, b, interaction_bias


if __name__ == "__main__":
    tokenizer = Tokenizer()

    B, S, H = 2, 8, 32
    key = jax.random.PRNGKey(0)
    kx, kp = jax.random.split(key)

    x = jax.random.normal(kx, (B, S, H), dtype=jnp.float32)
    w, b, interaction_bias = make_params(kp, H, tokenizer)

    out = enhanced_model_forward(x, w, b, interaction_bias)
    out = jax.block_until_ready(out)

    # Sanity check against a pure-JAX f32 reference of the same semantics.
    # Tolerance accounts for the bf16 cast of x / W inside the kernel.
    ref = (x.reshape(-1, H) @ w + b).reshape(B, S, -1) + interaction_bias[None, None, :]
    assert out.shape == (B, S, len(tokenizer))
    assert jnp.allclose(out, ref, atol=1e-2, rtol=1e-2), (
        float(jnp.max(jnp.abs(out - ref)))
    )

    print("KERNEL_OK")
</pallas_src>

<mosaic_0001>
module attributes {stable_mosaic.version = 11 : i64} {
  func.func @enhanced_head_kernel(%arg0: i32, %arg1: memref<16x32xbf16, #tpu.memory_space<vmem>>, %arg2: memref<32x128xbf16, #tpu.memory_space<vmem>>, %arg3: memref<1x128xf32, #tpu.memory_space<vmem>>, %arg4: memref<16x128xf32, #tpu.memory_space<vmem>>) attributes {dimension_semantics = [#tpu.dimension_semantics<parallel>], iteration_bounds = array<i64: 1>, scalar_prefetch = 0 : i64, scratch_operands = 0 : i64, tpu.core_type = #tpu.core_type<tc>, window_params = [{transform_indices = @transform_0, window_bounds = array<i64: 16, 32>}, {pipeline_mode = #tpu.pipeline_mode<synchronous>, transform_indices = @transform_1, window_bounds = array<i64: 32, 128>}, {pipeline_mode = #tpu.pipeline_mode<synchronous>, transform_indices = @transform_2, window_bounds = array<i64: 1, 128>}, {transform_indices = @transform_3, window_bounds = array<i64: 16, 128>}]} {
    %c0 = arith.constant 0 : index
    %c0_0 = arith.constant 0 : index
    %0 = vector.load %arg1[%c0, %c0_0] : memref<16x32xbf16, #tpu.memory_space<vmem>>, vector<16x32xbf16>
    %c0_1 = arith.constant 0 : index
    %c0_2 = arith.constant 0 : index
    %1 = vector.load %arg2[%c0_1, %c0_2] : memref<32x128xbf16, #tpu.memory_space<vmem>>, vector<32x128xbf16>
    %cst = arith.constant dense<0.000000e+00> : vector<16x128xf32>
    %2 = tpu.matmul %0, %1, %cst {dimension_numbers = #tpu.dot_dimension_numbers<[1], [0], [0], [1], [0, 0, 1, 1], [], []>} : vector<16x32xbf16>, vector<32x128xbf16>, vector<16x128xf32> -> vector<16x128xf32>
    %c0_3 = arith.constant 0 : index
    %c0_4 = arith.constant 0 : index
    %3 = vector.load %arg3[%c0_3, %c0_4] : memref<1x128xf32, #tpu.memory_space<vmem>>, vector<1x128xf32>
    %4 = vector.broadcast %3 : vector<1x128xf32> to vector<16x128xf32>
    %5 = arith.addf %2, %4 : vector<16x128xf32>
    %c0_5 = arith.constant 0 : index
    %c0_6 = arith.constant 0 : index
    %6 = vector.load %arg4[%c0_5, %c0_6] : memref<16x128xf32, #tpu.memory_space<vmem>>, vector<16x128xf32>
    tpu.vector_store %arg4[%c0_5, %c0_6], %5 {strides = array<i32>} : memref<16x128xf32, #tpu.memory_space<vmem>>, vector<16x128xf32>,
    return
  }
  func.func @transform_0(%arg0: i32) -> (i32, i32) {
    %c0_i32 = arith.constant 0 : i32
    %c0_i32_0 = arith.constant 0 : i32
    return %arg0, %c0_i32 : i32, i32
  }
  func.func @transform_1(%arg0: i32) -> (i32, i32) {
    %c0_i32 = arith.constant 0 : i32
    %c0_i32_0 = arith.constant 0 : i32
    %c0_i32_1 = arith.constant 0 : i32
    return %c0_i32, %c0_i32_0 : i32, i32
  }
  func.func @transform_2(%arg0: i32) -> (i32, i32) {
    %c0_i32 = arith.constant 0 : i32
    %c0_i32_0 = arith.constant 0 : i32
    %c0_i32_1 = arith.constant 0 : i32
    return %c0_i32, %c0_i32_0 : i32, i32
  }
  func.func @transform_3(%arg0: i32) -> (i32, i32) {
    %c0_i32 = arith.constant 0 : i32
    %c0_i32_0 = arith.constant 0 : i32
    return %arg0, %c0_i32 : i32, i32
  }
}

</mosaic_0001>

<llo_original>
// kernel: tpu_custom_call.1
$region0: #{tpu_custom_call.1}
  #allocation0 [shape = 'u32[]', space=smem, size = 0x4, offset = 0x4, fixed_abs, tag = 'smem constant byte address 0x4 - core index']
  #allocation1 [shape = 'u32[144,128]{1,0:T(1,128)}', space=vmem, size = 0x12000, scoped, tag = 'internal scratch']
  %s0 = inlined_call_operand.hbm [shape: bf16[16,32], index: 0, kind: input, shape index: {}]
  %s1 = inlined_call_operand.hbm [shape: bf16[32,128], index: 1, kind: input, shape index: {}]
  %s2 = inlined_call_operand.vmem [shape: f32[1,128], index: 2, kind: input, shape index: {}]
  %s3 = inlined_call_operand.hbm [shape: f32[16,128], index: 3, kind: output, shape index: {}]
  %s4 = sld [smem:[#allocation0]]
  $region30: #{tpu_custom_call.1} parent=0
    _
  %s6 = ssub.s32 1, %s4
  %s7 = scalar_select 0, %s6, %s4
  $region1: #{tpu_custom_call.1} parent=0
    #allocation2 [shape = 'u8[4096]{0}', space=vmem, size = 0x1000, scoped, tag = 'input window, operand 0, single buffered']
    #allocation3 [shape = 's32[1]{0}', space=sflag, size = 0x4, scoped, tag = 'scoped memory for tpu_custom_call.1']
    #allocation4 [shape = 's32[1]{0}', space=sflag, size = 0x4, scoped, tag = 'scoped memory for tpu_custom_call.1']
    #allocation5 [shape = 'u8[8192]{0}', space=vmem, size = 0x2000, scoped, tag = 'input window, operand 1, single buffered']
    #allocation6 [shape = 's32[1]{0}', space=sflag, size = 0x4, scoped, tag = 'scoped memory for tpu_custom_call.1']
    #allocation7 [shape = 'u8[8192]{0}', space=vmem, size = 0x2000, scoped, tag = 'output window, operand 0, single buffered']
    %8 = vsyncpa [#allocation3], 0
    %9 = vsyncpa [#allocation6], 0
    %10 = vsyncpa [#allocation4], 0
    // Predicated region
    $region2: #{tpu_custom_call.1} parent=1 // pred_check
      _
    $region3: #{tpu_custom_call.1} parent=1 // pred_check_branch
      %12 = sbr.rel (0) target = $region5
    $region4: #{tpu_custom_call.1} parent=1 // pred_region
      %s14 = ssub.s32 128, 128
      %15 = vsyncadd [#allocation3], %s14
      %s16 = sshll.u32 [#allocation2], 4
      %s17 = int_to_ptr.vmem [resolvable:$true] %s16
      %22 = dma.hbm_to_vmem [thread:$0]  %s0, 128, %s17, [#allocation3], 64, 64, 4
    $region5: #{tpu_custom_call.1} parent=1 // pred_fallthru
      _
    // Predicated region
    $region6: #{tpu_custom_call.1} parent=1 // pred_check
      _
    $region7: #{tpu_custom_call.1} parent=1 // pred_check_branch
      %24 = sbr.rel (0) target = $region9
    $region8: #{tpu_custom_call.1} parent=1 // pred_region
      %s26 = ssub.s32 256, 256
      %27 = vsyncadd [#allocation6], %s26
      %s28 = sshll.u32 [#allocation5], 4
      %s29 = int_to_ptr.vmem [resolvable:$true] %s28
      %34 = dma.hbm_to_vmem [thread:$0]  %s1, 256, %s29, [#allocation6], 64, 64, 4
    $region9: #{tpu_custom_call.1} parent=1 // pred_fallthru
      _
    // Predicated region
    $region10: #{tpu_custom_call.1} parent=1 // pred_check
      _
    $region11: #{tpu_custom_call.1} parent=1 // pred_check_branch
      %36 = sbr.rel (0) target = $region13
    $region12: #{tpu_custom_call.1} parent=1 // pred_region
      _
    $region13: #{tpu_custom_call.1} parent=1 // pred_fallthru
      _
    // Predicated region
    $region14: #{tpu_custom_call.1} parent=1 // pred_check
      _
    $region15: #{tpu_custom_call.1} parent=1 // pred_check_branch
      %38 = sbr.rel (0) target = $region17
    $region16: #{tpu_custom_call.1} parent=1 // pred_region
      %39 = dma.done [#allocation3], 128
    $region17: #{tpu_custom_call.1} parent=1 // pred_fallthru
      _
    // Predicated region
    $region18: #{tpu_custom_call.1} parent=1 // pred_check
      _
    $region19: #{tpu_custom_call.1} parent=1 // pred_check_branch
      %41 = sbr.rel (0) target = $region21
    $region20: #{tpu_custom_call.1} parent=1 // pred_region
      %42 = dma.done [#allocation6], 256
    $region21: #{tpu_custom_call.1} parent=1 // pred_fallthru
      _
    %v44 = vld [vmem:[#allocation2] sm:$0xf]
    %v45 = vld [vmem:[#allocation2 + $0x4] sm:$0xf]
    %v46 = vld [vmem:[#allocation5] sm:$0xf]
    %v47 = vld [vmem:[#allocation5 + $0x4] sm:$0xf]
    %v48 = vld [vmem:[#allocation5 + $0x8] sm:$0xf]
    %v49 = vld [vmem:[#allocation5 + $0xc] sm:$0xf]
    %v50 = vld [vmem:[%s2] sm:$0x1]
    %v52 = vlaneseq
    %v53 = vshrl.u32 %v52, 7
    %v54 = vsub.s32 0, %v53
    %v55 = vrot.slane %v50, %v54
    %v59 = vunpack.c.l.b16 %v44
    %v60 = vunpack.c.l.b16 %v45
    %v61 = vpack.c.b16 %v60, %v59
    %v66 = vunpack.c.l.b16 %v46
    %v67 = vunpack.c.l.b16 %v47
    %v68 = vunpack.c.l.b16 %v48
    %v69 = vunpack.c.l.b16 %v49
    %v70 = vpack.c.b16 %v67, %v66
    %v71 = vpack.c.b16 %v69, %v68
    %vm74 = vcmask 261120
    %v76 = vsel %vm74, %v61, 0
    %78 = vmatprep.subr.bf16.mxu0 0
    %79 = vmatpush1.bf16.msra.mxu0 %v70
    %80 = vmatprep.subr.bf16.mxu0 0
    %81 = vmatpush1.bf16.msra.mxu0 %v71
    %82 = vmatprep.subr.bf16.mxu0 0
    %83 = vmatpush1.bf16.msra.mxu0 0
    %84 = vmatprep.subr.bf16.mxu0 0
    %85 = vmatpush1.bf16.msra.mxu0 0
    %86 = vmatprep.subr.bf16.mxu0 0
    %87 = vmatpush1.bf16.msra.mxu0 0
    %88 = vmatprep.subr.bf16.mxu0 0
    %89 = vmatpush1.bf16.msra.mxu0 0
    %90 = vmatprep.subr.bf16.mxu0 0
    %91 = vmatpush1.bf16.msra.mxu0 0
    %92 = vmatprep.subr.bf16.mxu0 0
    %93 = vmatpush1.bf16.msra.mxu0 0
    %94 = vmatprep.subr.bf16.mxu0 0
    %95 = vmatpush1.bf16.msra.mxu0 0
    %96 = vmatprep.subr.bf16.mxu0 0
    %97 = vmatpush1.bf16.msra.mxu0 0
    %98 = vmatprep.subr.bf16.mxu0 0
    %99 = vmatpush1.bf16.msra.mxu0 0
    %100 = vmatprep.subr.bf16.mxu0 0
    %101 = vmatpush1.bf16.msra.mxu0 0
    %102 = vmatprep.subr.bf16.mxu0 0
    %103 = vmatpush1.bf16.msra.mxu0 0
    %104 = vmatprep.subr.bf16.mxu0 0
    %105 = vmatpush1.bf16.msra.mxu0 0
    %106 = vmatprep.subr.bf16.mxu0 0
    %107 = vmatpush1.bf16.msra.mxu0 0
    %108 = vmatprep.subr.bf16.mxu0 0
    %109 = vmatpush1.bf16.msra.mxu0 0
    %110 = vmatprep.mubr.bf16.mxu0 0
    %111 = vmatmul.mubr.bf16.gmra.mrb[0].mxu0 %v76
    %v112 = vpop.f32.mrb[0].mxu0
    %v113 = vadd.f32 %v55, %v112
    %v114 = vpop.f32.mrb[0].mxu0
    %v115 = vpop.f32.mrb[0].mxu0
    %v116 = vadd.f32 %v55, %v115
    %v117 = vpop.f32.mrb[0].mxu0
    %118 = vdwg.mxu0
    %119 = vst [vmem:[#allocation7] sm:$0xff] %v113
    %120 = vst [vmem:[#allocation7 + $0x8] sm:$0xff] %v116
    // Predicated region
    $region22: #{tpu_custom_call.1} parent=1 // pred_check
      _
    $region23: #{tpu_custom_call.1} parent=1 // pred_check_branch
      %122 = sbr.rel (0) target = $region25
    $region24: #{tpu_custom_call.1} parent=1 // pred_region
      %s124 = ssub.s32 256, 256
      %125 = vsyncadd [#allocation4], %s124
      %s126 = sshll.u32 [#allocation7], 4
      %s127 = int_to_ptr.vmem [resolvable:$true] %s126
      %132 = dma.vmem_to_hbm [thread:$0]  %s127, 256, %s3, [#allocation4], 128, 128, 8
    $region25: #{tpu_custom_call.1} parent=1 // pred_fallthru
      _
    // Predicated region
    $region26: #{tpu_custom_call.1} parent=1 // pred_check
      _
    $region27: #{tpu_custom_call.1} parent=1 // pred_check_branch
      %134 = sbr.rel (0) target = $region29
    $region28: #{tpu_custom_call.1} parent=1 // pred_region
      %135 = dma.done [#allocation4], 256
    $region29: #{tpu_custom_call.1} parent=1 // pred_fallthru
      _
    %136 = vsyncpa [#allocation3], 1
    %137 = vsyncpa [#allocation6], 1
    %138 = vsyncpa [#allocation4], 1

</llo_original>
